<compile_context>
chip_gen: v5e
topology: v5e:2x2
jax: 0.10.0
libtpu: 0.0.40
codegen_flags: <defaults>
</compile_context>

<pallas_src>
import functools
import math

import jax
import jax.numpy as jnp
from jax.experimental import pallas as pl
from jax.experimental.pallas import tpu as pltpu


def _round_up(x, m):
    return ((x + m - 1) // m) * m


def _nce_nnce_kernel(pred_ref, labels_ref, out_ref, *, A, n_total):
    i = pl.program_id(0)

    x = pred_ref[...].astype(jnp.float32)             # (tm, C)
    lbl = labels_ref[...]                              # (tm, 1) int32
    tm, C = x.shape

    # Row-validity mask for the over-run rows of the last tile (no wrapper pad).
    row_local = jax.lax.broadcasted_iota(jnp.int32, (tm, 1), 0)
    valid = (i * tm + row_local) < n_total              # (tm, 1) bool

    # Shifted logits; exp(z) is the only per-element transcendental pass.
    m = jnp.max(x, axis=1, keepdims=True)               # (tm, 1)
    z = x - m
    sum_z = jnp.sum(z, axis=1, keepdims=True)           # (tm, 1)
    lse = jnp.log(jnp.sum(jnp.exp(z), axis=1, keepdims=True))   # (tm, 1)

    # Label-class shifted logit via a single select (no one_hot, no logp).
    class_ids = jax.lax.broadcasted_iota(jnp.int32, (tm, C), 1)
    is_label = class_ids == lbl
    picked_z = jnp.sum(jnp.where(is_label, z, 0.0), axis=1, keepdims=True)
    picked_logp = picked_z - lse                         # log p[label], (tm, 1)

    # sum(logp) = sum(z) - C * lse   (shift-stable form).
    sum_logp = sum_z - C * lse                           # (tm, 1), always < 0

    # ---- NCE: -picked_logp / -sum_logp ----
    nce_rows = picked_logp * pl.reciprocal(sum_logp, approx=True)

    # ---- NNCE: q = A + log(clip(softmax, min_prob, 1)) == max(z + (A-lse), 0)
    c = A - lse                                          # (tm, 1)
    q = jnp.maximum(z + c, 0.0)                          # (tm, C)
    nnce_den = jnp.maximum(jnp.sum(q, axis=1, keepdims=True), 1e-30)
    nnce_num = jnp.maximum(picked_logp + A, 0.0)         # q at the label class
    nnce_rows = 1.0 - nnce_num * pl.reciprocal(nnce_den, approx=True)

    nce_part = jnp.sum(jnp.where(valid, nce_rows, 0.0))
    nnce_part = jnp.sum(jnp.where(valid, nnce_rows, 0.0))

    # Lane-dense (8, 128) partials block: sublane 0 = NCE, sublane 1 = NNCE.
    rid = jax.lax.broadcasted_iota(jnp.int32, (8, 128), 0)
    tile = jnp.where(rid == 0, nce_part, jnp.where(rid == 1, nnce_part, 0.0))
    out_ref[...] = tile[None, :, :].astype(out_ref.dtype)


def _tpu_vmem_capacity_bytes():
    try:
        return int(pltpu.get_tpu_info().vmem_capacity_bytes)
    except Exception:
        return 128 * 1024 * 1024


def _dimension_semantics(grid_rows):
    # v7x has two independent TensorCores per chip; plain "parallel" does not
    # shard the row grid across them, CORE_PARALLEL does.  The per-tile
    # partials output makes this safe (no cross-core accumulator).
    try:
        kind = jax.devices()[0].device_kind.lower()
    except Exception:
        kind = ""
    if grid_rows >= 2 and "7" in kind and hasattr(pltpu, "CORE_PARALLEL"):
        return (pltpu.CORE_PARALLEL,)
    return ("parallel",)


def _sublane_multiple(itemsize):
    return max(8, 32 // max(1, itemsize))   # 8 for f32, 16 for bf16, 32 for i8


def _choose_tiling(n_rows, n_classes, itemsize):
    """Row tile + VMEM limit sized from the real per-row working set."""
    vmem_cap = _tpu_vmem_capacity_bytes()          # 128 MiB v5e/v6e, 64 MiB v7x
    # ~64 MiB on 128 MiB parts, ~40 MiB on v7x's 64 MiB parts.
    vmem_limit = min(64 * 1024 * 1024, (vmem_cap * 5) // 8)

    # Per-row working set (bytes):
    #   double-buffered pred input tile (native dtype) : 2 * C * itemsize
    #   ~4 live f32 (tm, C) temporaries (x/z, exp/select, q)
    #                                                  : 4 * C * 4
    #   (tm, 1) int32 labels block lane-padded to 128, double-buffered
    #                                                  : 2 * 128 * 4
    per_row = 2 * n_classes * itemsize + 4 * n_classes * 4 + 2 * 128 * 4
    budget = (vmem_limit * 3) // 4                 # headroom for pipeline/scratch

    sub = _sublane_multiple(itemsize)
    tm = max(sub, budget // per_row)
    tm = min(tm, 8192, _round_up(n_rows, sub))
    tm = max(sub, (tm // sub) * sub)
    return tm, vmem_limit


def nce_nnce_loss(pred, labels, *, num_classes, alpha, beta,
                  min_prob=1e-7, tm=None):
    """Pallas TPU implementation of NCE_NNCE.forward(pred, labels)."""
    N, C = pred.shape
    assert C == num_classes, "pred class dim must equal num_classes"
    A = -math.log(min_prob)

    itemsize = jnp.dtype(pred.dtype).itemsize
    auto_tm, vmem_limit = _choose_tiling(N, C, itemsize)
    sub = _sublane_multiple(itemsize)
    tm = auto_tm if tm is None else max(sub, _round_up(tm, sub))

    grid_rows = pl.cdiv(N, tm)
    labels2d = labels.astype(jnp.int32).reshape(N, 1)

    kernel = functools.partial(_nce_nnce_kernel, A=float(A), n_total=N)

    cost = pl.CostEstimate(
        flops=10 * N * C,
        transcendentals=N * C,
        bytes_accessed=N * C * itemsize + N * 4 + grid_rows * 8 * 128 * 4,
    )

    partials = pl.pallas_call(
        kernel,
        out_shape=jax.ShapeDtypeStruct((grid_rows, 8, 128), jnp.float32),
        grid_spec=pltpu.PrefetchScalarGridSpec(
            num_scalar_prefetch=0,
            grid=(grid_rows,),
            in_specs=[
                pl.BlockSpec((tm, C), lambda i: (i, 0)),   # pred (native dtype)
                pl.BlockSpec((tm, 1), lambda i: (i, 0)),   # labels
            ],
            out_specs=pl.BlockSpec((1, 8, 128), lambda i: (i, 0, 0)),
        ),
        compiler_params=pltpu.CompilerParams(
            dimension_semantics=_dimension_semantics(grid_rows),
            vmem_limit_bytes=int(vmem_limit)),
        cost_estimate=cost,
    )(pred, labels2d)

    nce_total = jnp.sum(partials[:, 0, 0])
    nnce_total = jnp.sum(partials[:, 1, 0])
    return (alpha * nce_total + beta * nnce_total) / jnp.float32(N)


def _reference_loss(pred, labels, *, num_classes, alpha, beta, min_prob=1e-7):
    """Pure-JAX reference mirroring the PyTorch module."""
    A = -jnp.log(jnp.float32(min_prob))
    logp = jax.nn.log_softmax(pred.astype(jnp.float32), axis=1)
    one_hot = jax.nn.one_hot(labels, num_classes, dtype=jnp.float32)
    nce = -jnp.sum(one_hot * logp, axis=1) / (-jnp.sum(logp, axis=1))

    p = jax.nn.softmax(pred.astype(jnp.float32), axis=1)
    p = jnp.clip(p, min_prob, 1.0)
    q = A + jnp.log(p)
    nnce = 1.0 - jnp.sum(one_hot * q, axis=1) / jnp.sum(q, axis=1)
    return alpha * jnp.mean(nce) + beta * jnp.mean(nnce)


if __name__ == "__main__":
    num_classes = 8
    N = 16
    alpha, beta = 1.0, 1.0

    key = jax.random.PRNGKey(0)
    k_pred, k_lbl = jax.random.split(key)
    pred = jax.random.normal(k_pred, (N, num_classes), dtype=jnp.float32)
    labels = jax.random.randint(k_lbl, (N,), 0, num_classes, dtype=jnp.int32)

    # approx reciprocal (EUP) is used for the per-row divides -> slightly
    # relaxed tolerances vs. the exact-divide reference.
    loss = jax.block_until_ready(
        nce_nnce_loss(pred, labels, num_classes=num_classes,
                      alpha=alpha, beta=beta))
    ref = _reference_loss(pred, labels, num_classes=num_classes,
                          alpha=alpha, beta=beta)
    assert jnp.allclose(loss, ref, rtol=1e-3, atol=1e-4), (loss, ref)

    # Ragged batch + forced small tile: exercises the padding-free over-run
    # block, the in-kernel row mask, and a multi-step grid.
    N2 = 13
    pred2 = jax.random.normal(jax.random.PRNGKey(1), (N2, num_classes),
                              dtype=jnp.float32)
    labels2 = jax.random.randint(jax.random.PRNGKey(2), (N2,), 0, num_classes,
                                 dtype=jnp.int32)
    loss2 = jax.block_until_ready(
        nce_nnce_loss(pred2, labels2, num_classes=num_classes,
                      alpha=0.5, beta=2.0, tm=8))
    ref2 = _reference_loss(pred2, labels2, num_classes=num_classes,
                           alpha=0.5, beta=2.0)
    assert jnp.allclose(loss2, ref2, rtol=1e-3, atol=1e-4), (loss2, ref2)

    # Large common logit offset: exercises the shift-stable sum(logp) path.
    pred3 = pred + 1000.0
    loss3 = jax.block_until_ready(
        nce_nnce_loss(pred3, labels, num_classes=num_classes,
                      alpha=alpha, beta=beta))
    ref3 = _reference_loss(pred3, labels, num_classes=num_classes,
                           alpha=alpha, beta=beta)
    assert jnp.allclose(loss3, ref3, rtol=1e-3, atol=1e-4), (loss3, ref3)

    print("KERNEL_OK")
</pallas_src>

<mosaic_0001>
module attributes {stable_mosaic.version = 11 : i64} {
  func.func @_nce_nnce_kernel(%arg0: i32, %arg1: memref<16x8xf32, #tpu.memory_space<vmem>>, %arg2: memref<16x1xi32, #tpu.memory_space<vmem>>, %arg3: memref<1x8x128xf32, #tpu.memory_space<vmem>>) attributes {dimension_semantics = [#tpu.dimension_semantics<parallel>], iteration_bounds = array<i64: 1>, scalar_prefetch = 0 : i64, scratch_operands = 0 : i64, tpu.core_type = #tpu.core_type<tc>, window_params = [{transform_indices = @transform_0, window_bounds = array<i64: 16, 8>}, {transform_indices = @transform_1, window_bounds = array<i64: 16, 1>}, {transform_indices = @transform_2, window_bounds = array<i64: 1, 8, 128>}]} {
    %c0 = arith.constant 0 : index
    %c0_0 = arith.constant 0 : index
    %0 = vector.load %arg1[%c0, %c0_0] : memref<16x8xf32, #tpu.memory_space<vmem>>, vector<16x8xf32>
    %c0_1 = arith.constant 0 : index
    %c0_2 = arith.constant 0 : index
    %1 = vector.load %arg2[%c0_1, %c0_2] : memref<16x1xi32, #tpu.memory_space<vmem>>, vector<16x1xi32>
    %2 = tpu.iota {dimensions = array<i32: 0>} : vector<16x1xi32>
    %c16_i32 = arith.constant 16 : i32
    %3 = arith.muli %arg0, %c16_i32 : i32
    %4 = vector.broadcast %3 : i32 to vector<16x1xi32>
    %5 = arith.addi %4, %2 : vector<16x1xi32>
    %c16_i32_3 = arith.constant 16 : i32
    %6 = vector.broadcast %c16_i32_3 : i32 to vector<16x1xi32>
    %7 = arith.cmpi slt, %5, %6 : vector<16x1xi32>
    %cst = arith.constant dense<0xFF800000> : vector<16xf32>
    %8 = vector.multi_reduction <maximumf>, %0, %cst [1] : vector<16x8xf32> to vector<16xf32>
    %9 = vector.shape_cast %8 : vector<16xf32> to vector<16x1xf32>
    %10 = vector.broadcast %9 : vector<16x1xf32> to vector<16x8xf32>
    %11 = arith.subf %0, %10 : vector<16x8xf32>
    %cst_4 = arith.constant dense<0.000000e+00> : vector<16xf32>
    %12 = vector.multi_reduction <add>, %11, %cst_4 [1] : vector<16x8xf32> to vector<16xf32>
    %13 = vector.shape_cast %12 : vector<16xf32> to vector<16x1xf32>
    %14 = math.exp %11 : vector<16x8xf32>
    %cst_5 = arith.constant dense<0.000000e+00> : vector<16xf32>
    %15 = vector.multi_reduction <add>, %14, %cst_5 [1] : vector<16x8xf32> to vector<16xf32>
    %16 = vector.shape_cast %15 : vector<16xf32> to vector<16x1xf32>
    %17 = math.log %16 : vector<16x1xf32>
    %18 = tpu.iota {dimensions = array<i32: 1>} : vector<16x8xi32>
    %19 = vector.broadcast %1 : vector<16x1xi32> to vector<16x8xi32>
    %20 = arith.cmpi eq, %18, %19 : vector<16x8xi32>
    %cst_6 = arith.constant 0.000000e+00 : f32
    %21 = vector.broadcast %cst_6 : f32 to vector<16x8xf32>
    %22 = arith.select %20, %11, %21 : vector<16x8xi1>, vector<16x8xf32>
    %cst_7 = arith.constant dense<0.000000e+00> : vector<16xf32>
    %23 = vector.multi_reduction <add>, %22, %cst_7 [1] : vector<16x8xf32> to vector<16xf32>
    %24 = vector.shape_cast %23 : vector<16xf32> to vector<16x1xf32>
    %25 = arith.subf %24, %17 : vector<16x1xf32>
    %cst_8 = arith.constant 8.000000e+00 : f32
    %26 = vector.broadcast %cst_8 : f32 to vector<16x1xf32>
    %27 = arith.mulf %26, %17 : vector<16x1xf32>
    %28 = arith.subf %13, %27 : vector<16x1xf32>
    %29 = tpu.reciprocal %28 {approx = true} : vector<16x1xf32> -> vector<16x1xf32>
    %30 = arith.mulf %25, %29 : vector<16x1xf32>
    %cst_9 = arith.constant 16.1180954 : f32
    %31 = vector.broadcast %cst_9 : f32 to vector<16x1xf32>
    %32 = arith.subf %31, %17 : vector<16x1xf32>
    %33 = vector.broadcast %32 : vector<16x1xf32> to vector<16x8xf32>
    %34 = arith.addf %11, %33 : vector<16x8xf32>
    %cst_10 = arith.constant 0.000000e+00 : f32
    %35 = vector.broadcast %cst_10 : f32 to vector<16x8xf32>
    %36 = arith.maximumf %34, %35 : vector<16x8xf32>
    %cst_11 = arith.constant dense<0.000000e+00> : vector<16xf32>
    %37 = vector.multi_reduction <add>, %36, %cst_11 [1] : vector<16x8xf32> to vector<16xf32>
    %38 = vector.shape_cast %37 : vector<16xf32> to vector<16x1xf32>
    %cst_12 = arith.constant 1.000000e-30 : f32
    %39 = vector.broadcast %cst_12 : f32 to vector<16x1xf32>
    %40 = arith.maximumf %38, %39 : vector<16x1xf32>
    %cst_13 = arith.constant 16.1180954 : f32
    %41 = vector.broadcast %cst_13 : f32 to vector<16x1xf32>
    %42 = arith.addf %25, %41 : vector<16x1xf32>
    %cst_14 = arith.constant 0.000000e+00 : f32
    %43 = vector.broadcast %cst_14 : f32 to vector<16x1xf32>
    %44 = arith.maximumf %42, %43 : vector<16x1xf32>
    %45 = tpu.reciprocal %40 {approx = true} : vector<16x1xf32> -> vector<16x1xf32>
    %46 = arith.mulf %44, %45 : vector<16x1xf32>
    %cst_15 = arith.constant 1.000000e+00 : f32
    %47 = vector.broadcast %cst_15 : f32 to vector<16x1xf32>
    %48 = arith.subf %47, %46 : vector<16x1xf32>
    %cst_16 = arith.constant 0.000000e+00 : f32
    %49 = vector.broadcast %cst_16 : f32 to vector<16x1xf32>
    %50 = arith.select %7, %30, %49 : vector<16x1xi1>, vector<16x1xf32>
    %51 = vector.shape_cast %50 : vector<16x1xf32> to vector<1x16x1xf32>
    %cst_17 = arith.constant dense<0.000000e+00> : vector<1xf32>
    %52 = vector.multi_reduction <add>, %51, %cst_17 [1, 2] : vector<1x16x1xf32> to vector<1xf32>
    %53 = vector.shape_cast %52 : vector<1xf32> to vector<1x1x1xf32>
    %54 = vector.extract %53[0, 0, 0] : f32 from vector<1x1x1xf32>
    %cst_18 = arith.constant 0.000000e+00 : f32
    %55 = vector.broadcast %cst_18 : f32 to vector<16x1xf32>
    %56 = arith.select %7, %48, %55 : vector<16x1xi1>, vector<16x1xf32>
    %57 = vector.shape_cast %56 : vector<16x1xf32> to vector<1x16x1xf32>
    %cst_19 = arith.constant dense<0.000000e+00> : vector<1xf32>
    %58 = vector.multi_reduction <add>, %57, %cst_19 [1, 2] : vector<1x16x1xf32> to vector<1xf32>
    %59 = vector.shape_cast %58 : vector<1xf32> to vector<1x1x1xf32>
    %60 = vector.extract %59[0, 0, 0] : f32 from vector<1x1x1xf32>
    %61 = tpu.iota {dimensions = array<i32: 0>} : vector<8x128xi32>
    %c0_i32 = arith.constant 0 : i32
    %62 = vector.broadcast %c0_i32 : i32 to vector<8x128xi32>
    %63 = arith.cmpi eq, %61, %62 : vector<8x128xi32>
    %c1_i32 = arith.constant 1 : i32
    %64 = vector.broadcast %c1_i32 : i32 to vector<8x128xi32>
    %65 = arith.cmpi eq, %61, %64 : vector<8x128xi32>
    %cst_20 = arith.constant 0.000000e+00 : f32
    %66 = vector.broadcast %60 : f32 to vector<8x128xf32>
    %67 = vector.broadcast %cst_20 : f32 to vector<8x128xf32>
    %68 = arith.select %65, %66, %67 : vector<8x128xi1>, vector<8x128xf32>
    %69 = vector.broadcast %54 : f32 to vector<8x128xf32>
    %70 = arith.select %63, %69, %68 : vector<8x128xi1>, vector<8x128xf32>
    %71 = vector.shape_cast %70 : vector<8x128xf32> to vector<1x8x128xf32>
    %c0_21 = arith.constant 0 : index
    %c0_22 = arith.constant 0 : index
    %c0_23 = arith.constant 0 : index
    %72 = vector.load %arg3[%c0_21, %c0_22, %c0_23] : memref<1x8x128xf32, #tpu.memory_space<vmem>>, vector<1x8x128xf32>
    tpu.vector_store %arg3[%c0_21, %c0_22, %c0_23], %71 {strides = array<i32>} : memref<1x8x128xf32, #tpu.memory_space<vmem>>, vector<1x8x128xf32>,
    return
  }
  func.func @transform_0(%arg0: i32) -> (i32, i32) {
    %c0_i32 = arith.constant 0 : i32
    %c0_i32_0 = arith.constant 0 : i32
    return %arg0, %c0_i32 : i32, i32
  }
  func.func @transform_1(%arg0: i32) -> (i32, i32) {
    %c0_i32 = arith.constant 0 : i32
    %c0_i32_0 = arith.constant 0 : i32
    return %arg0, %c0_i32 : i32, i32
  }
  func.func @transform_2(%arg0: i32) -> (i32, i32, i32) {
    %c0_i32 = arith.constant 0 : i32
    %c0_i32_0 = arith.constant 0 : i32
    %c0_i32_1 = arith.constant 0 : i32
    return %arg0, %c0_i32, %c0_i32_0 : i32, i32, i32
  }
}

</mosaic_0001>

<llo_original>
// kernel: tpu_custom_call.1
$region0: #{tpu_custom_call.1}
  #allocation0 [shape = 'u32[]', space=smem, size = 0x4, offset = 0x4, fixed_abs, tag = 'smem constant byte address 0x4 - core index']
  #allocation1 [shape = 'u32[72,128]{1,0:T(1,128)}', space=vmem, size = 0x9000, scoped, tag = 'internal scratch']
  %s0 = inlined_call_operand.vmem [shape: f32[16,8], index: 0, kind: input, shape index: {}]
  %s1 = inlined_call_operand.vmem [shape: s32[16,1], index: 1, kind: input, shape index: {}]
  %s2 = inlined_call_operand.hbm [shape: f32[1,8,128], index: 2, kind: output, shape index: {}]
  %s3 = sld [smem:[#allocation0]]
  $region18: #{tpu_custom_call.1} parent=0
    _
  %s5 = ssub.s32 1, %s3
  %s6 = scalar_select 0, %s5, %s3
  $region1: #{tpu_custom_call.1} parent=0
    #allocation2 [shape = 'u8[4096]{0}', space=vmem, size = 0x1000, scoped, tag = 'output window, operand 0, single buffered']
    #allocation3 [shape = 's32[1]{0}', space=sflag, size = 0x4, scoped, tag = 'scoped memory for tpu_custom_call.1']
    %7 = vsyncpa [#allocation3], 0
    // Predicated region
    $region2: #{tpu_custom_call.1} parent=1 // pred_check
      _
    $region3: #{tpu_custom_call.1} parent=1 // pred_check_branch
      %9 = sbr.rel (0) target = $region5
    $region4: #{tpu_custom_call.1} parent=1 // pred_region
      _
    $region5: #{tpu_custom_call.1} parent=1 // pred_fallthru
      _
    // Predicated region
    $region6: #{tpu_custom_call.1} parent=1 // pred_check
      _
    $region7: #{tpu_custom_call.1} parent=1 // pred_check_branch
      %11 = sbr.rel (0) target = $region9
    $region8: #{tpu_custom_call.1} parent=1 // pred_region
      _
    $region9: #{tpu_custom_call.1} parent=1 // pred_fallthru
      _
    %v12 = vld [vmem:[%s0] sm:$0xff]
    %v13 = vld [vmem:[%s0 + $0x8] sm:$0xff]
    %v14 = vld [vmem:[%s1] sm:$0xff]
    %v15 = vld [vmem:[%s1 + $0x8] sm:$0xff]
    %v16 = vlaneseq
    %v17 = vshrl.u32 %v16, 7
    %v18 = vadd.s32 %v17, 8
    %s19 = smul.u32 0, 16
    %v20 = vstv %s19
    %v21 = vadd.s32 %v20, %v17
    %v22 = vadd.s32 %v20, %v18
    %vm23 = vcmp.lt.s32.totalorder %v21, 16
    %vm24 = vcmp.lt.s32.totalorder %v22, 16
    %vm25 = vcmask 64512
    %v26 = vsel %vm25, %v12, -inf
    %27 = vmax.xlane.f32.xlu0 %v26
    %v28 = vpop.xlane.xlu0 %27
    %v29 = vsel %vm25, %v13, -inf
    %30 = vmax.xlane.f32.xlu0 %v29
    %v31 = vpop.xlane.xlu0 %30
    %v32 = vsub.f32 %v12, %v28
    %v33 = vsub.f32 %v13, %v31
    %v34 = vsel %vm25, %v32, 0.0
    %35 = vadd.xlane.f32.xlu0 %v34
    %v36 = vpop.xlane.xlu0 %35
    %v37 = vsel %vm25, %v33, 0.0
    %38 = vadd.xlane.f32.xlu0 %v37
    %v39 = vpop.xlane.xlu0 %38
    %v40 = vmul.f32 %v32, 1.442695
    %v41 = vpow.pop %v40
    %v42 = vmul.f32 %v33, 1.442695
    %v43 = vpow.pop %v42
    %v44 = vsel %vm25, %v41, 0.0
    %45 = vadd.xlane.f32.xlu0 %v44
    %v46 = vpop.xlane.xlu0 %45
    %v47 = vsel %vm25, %v43, 0.0
    %48 = vadd.xlane.f32.xlu0 %v47
    %v49 = vpop.xlane.xlu0 %48
    %v50 = vlog2.pop %v46
    %v51 = vmul.f32 %v50, 0.6931472
    %v52 = vlog2.pop %v49
    %v53 = vmul.f32 %v52, 0.6931472
    %v54 = vlaneseq
    %v55 = vand.u32 %v54, 127
    %56 = vset.pattern.permute.xlu0 0
    %57 = vperm.xlu0 %56, %v14
    %v58 = vpop.permute.xlu0 %57
    %59 = vset.pattern.permute.xlu0 0
    %60 = vperm.xlu0 %59, %v15
    %v61 = vpop.permute.xlu0 %60
    %vm62 = vcmp.eq.s32.totalorder %v55, %v58
    %vm63 = vcmp.eq.s32.totalorder %v55, %v61
    %v64 = vsel %vm62, %v32, 0.0
    %v65 = vsel %vm63, %v33, 0.0
    %v66 = vsel %vm25, %v64, 0.0
    %67 = vadd.xlane.f32.xlu0 %v66
    %v68 = vpop.xlane.xlu0 %67
    %v69 = vsel %vm25, %v65, 0.0
    %70 = vadd.xlane.f32.xlu0 %v69
    %v71 = vpop.xlane.xlu0 %70
    %v72 = vsub.f32 %v68, %v51
    %v73 = vsub.f32 %v71, %v53
    %v74 = vmul.f32 %v51, 8.0
    %v75 = vmul.f32 %v53, 8.0
    %v76 = vsub.f32 %v36, %v74
    %v77 = vsub.f32 %v39, %v75
    %v78 = vrcp.pop %v76
    %v79 = vrcp.pop %v77
    %v80 = vmul.f32 %v72, %v78
    %v81 = vmul.f32 %v73, %v79
    %v82 = vsub.f32 16.118095, %v51
    %v83 = vsub.f32 16.118095, %v53
    %v84 = vadd.f32 %v32, %v82
    %v85 = vadd.f32 %v33, %v83
    %v86 = vmax.f32 %v84, 0.0
    %v87 = vmax.f32 %v85, 0.0
    %v88 = vsel %vm25, %v86, 0.0
    %89 = vadd.xlane.f32.xlu0 %v88
    %v90 = vpop.xlane.xlu0 %89
    %v91 = vsel %vm25, %v87, 0.0
    %92 = vadd.xlane.f32.xlu0 %v91
    %v93 = vpop.xlane.xlu0 %92
    %v94 = vmax.f32 %v90, 1e-30
    %v95 = vmax.f32 %v93, 1e-30
    %v96 = vadd.f32 %v72, 16.118095
    %v97 = vadd.f32 %v73, 16.118095
    %v98 = vmax.f32 %v96, 0.0
    %v99 = vmax.f32 %v97, 0.0
    %v100 = vrcp.pop %v94
    %v101 = vrcp.pop %v95
    %v102 = vmul.f32 %v98, %v100
    %v103 = vmul.f32 %v99, %v101
    %v104 = vsub.f32 1.0, %v102
    %v105 = vsub.f32 1.0, %v103
    %v106 = vsel %vm23, %v80, 0.0
    %v107 = vsel %vm24, %v81, 0.0
    %vm108 = vcmask 7168
    %v109 = vsel %vm108, %v106, 0.0
    %v110 = vsel %vm108, %v107, 0.0
    %v111 = vadd.f32 %v109, %v110
    %112 = vadd.xlane.f32.xlu0 %v111
    %v113 = vpop.xlane.xlu0 %112
    %v114 = vrot.slane %v113, 4
    %v115 = vadd.f32 %v113, %v114
    %v116 = vrot.slane %v115, 2
    %v117 = vadd.f32 %v115, %v116
    %v118 = vrot.slane %v117, 1
    %v119 = vadd.f32 %v117, %v118
    %s120 = vtos %v119
    %v121 = vsel %vm23, %v104, 0.0
    %v122 = vsel %vm24, %v105, 0.0
    %v123 = vsel %vm108, %v121, 0.0
    %v124 = vsel %vm108, %v122, 0.0
    %v125 = vadd.f32 %v123, %v124
    %126 = vadd.xlane.f32.xlu0 %v125
    %v127 = vpop.xlane.xlu0 %126
    %v128 = vrot.slane %v127, 4
    %v129 = vadd.f32 %v127, %v128
    %v130 = vrot.slane %v129, 2
    %v131 = vadd.f32 %v129, %v130
    %v132 = vrot.slane %v131, 1
    %v133 = vadd.f32 %v131, %v132
    %s134 = vtos %v133
    %vm135 = vcmp.eq.s32.totalorder %v17, 0
    %vm136 = vcmp.eq.s32.totalorder %v17, 1
    %v137 = vstv %s134
    %v138 = vsel %vm136, %v137, 0.0
    %v139 = vstv %s120
    %v140 = vsel %vm135, %v139, %v138
    %141 = vst [vmem:[#allocation2] sm:$0xff] %v140
    // Predicated region
    $region10: #{tpu_custom_call.1} parent=1 // pred_check
      _
    $region11: #{tpu_custom_call.1} parent=1 // pred_check_branch
      %143 = sbr.rel (0) target = $region13
    $region12: #{tpu_custom_call.1} parent=1 // pred_region
      %145 = vsyncadd [#allocation3], 0
      %s147 = sshll.u32 [#allocation2], 4
      %s148 = int_to_ptr.vmem [resolvable:$true] %s147
      %s149 = sshll.u32 %s2, 4
      %s150 = int_to_ptr.hbm [resolvable:$true] %s149
      %152 = dma.vmem_to_hbm [thread:$0]  %s148, 128, %s150, [#allocation3]
    $region13: #{tpu_custom_call.1} parent=1 // pred_fallthru
      _
    // Predicated region
    $region14: #{tpu_custom_call.1} parent=1 // pred_check
      _
    $region15: #{tpu_custom_call.1} parent=1 // pred_check_branch
      %154 = sbr.rel (0) target = $region17
    $region16: #{tpu_custom_call.1} parent=1 // pred_region
      %156 = dma.done [#allocation3], 128
    $region17: #{tpu_custom_call.1} parent=1 // pred_fallthru
      _
    %157 = vsyncpa [#allocation3], 1

</llo_original>
